<compile_context>
chip_gen: v7x
topology: tpu7x:2x2x1
jax: 0.10.0
libtpu: 0.0.40
codegen_flags: <defaults>
</compile_context>

<pallas_src>
import functools

import jax
import jax.numpy as jnp
from jax.experimental import pallas as pl
from jax.experimental.pallas import tpu as pltpu

NEG_SLOPE = 0.2   # nn.LeakyReLU(negative_slope=0.2)
BN_EPS = 1e-5     # nn.BatchNorm2d default eps


# ----------------------------- Pallas kernel -------------------------------

def _conv_bn_lrelu_kernel(p_ref, w_ref, b_ref, g_ref, bb_ref, o_ref,
                          *, apply_bn, apply_lrelu, inv_m):
    """Fused ConvBlock on one (Cout, M) slab.

    p_ref : (K, M)    bf16  im2col patch matrix (transposed, lane axis = M)
    w_ref : (Cout, K) bf16  flattened conv weight
    b_ref : (Cout, 1) f32   conv bias
    g_ref : (Cout, 1) f32   BN gamma (ignored if apply_bn=False)
    bb_ref: (Cout, 1) f32   BN beta  (ignored if apply_bn=False)
    o_ref : (Cout, M) f32
    """
    y = jnp.dot(w_ref[...], p_ref[...], preferred_element_type=jnp.float32)
    y = y + b_ref[...]                                   # broadcast over lanes

    if apply_bn:
        # Training-mode batch stats over N,H,W (== axis 1 here), single pass.
        s = jnp.sum(y, axis=1, keepdims=True)
        ss = jnp.sum(y * y, axis=1, keepdims=True)
        mean = s * inv_m
        var = jnp.maximum(ss * inv_m - mean * mean, 0.0)  # biased var
        y = (y - mean) * jax.lax.rsqrt(var + BN_EPS) * g_ref[...] + bb_ref[...]

    if apply_lrelu:
        y = jnp.where(y > 0, y, NEG_SLOPE * y)

    o_ref[...] = y


# ------------------------------- glue / wrapper ----------------------------

def _im2col_T(x_cnhw, kh=4, kw=4, stride=2, pad=1):
    """(C, N, H, W) -> (K, M) = (C*KH*KW, N*OH*OW), feature order [cin, kh, kw]."""
    c, n, h, w = x_cnhw.shape
    xp = jnp.pad(x_cnhw, ((0, 0), (0, 0), (pad, pad), (pad, pad)))
    oh = (h + 2 * pad - kh) // stride + 1
    ow = (w + 2 * pad - kw) // stride + 1
    cols = [xp[:, :, i:i + stride * oh:stride, j:j + stride * ow:stride]
            for i in range(kh) for j in range(kw)]
    # (C, KH*KW, N, OH, OW) -> (C*KH*KW, N*OH*OW); matches OIHW weight flatten.
    p_t = jnp.stack(cols, axis=1).reshape(c * kh * kw, n * oh * ow)
    return p_t, oh, ow


def conv_block_pallas(x_cnhw, p):
    """ConvBlock on a (C, N, H, W) activation; returns (Cout, N, OH, OW)."""
    c, n, h, w = x_cnhw.shape
    cout = p["w2d"].shape[0]

    # bf16 MXU operands (halves patch-matrix bytes); epilogue stays f32.
    patches_t, oh, ow = _im2col_T(x_cnhw.astype(jnp.bfloat16))
    k, m = patches_t.shape

    kernel = functools.partial(
        _conv_bn_lrelu_kernel,
        apply_bn=p["bn"],
        apply_lrelu=p["lrelu"],
        inv_m=1.0 / m,
    )

    y = pl.pallas_call(
        kernel,
        out_shape=jax.ShapeDtypeStruct((cout, m), jnp.float32),
        grid=(1,),
        in_specs=[
            pl.BlockSpec((k, m), lambda i: (0, 0)),
            pl.BlockSpec((cout, k), lambda i: (0, 0)),
            pl.BlockSpec((cout, 1), lambda i: (0, 0)),
            pl.BlockSpec((cout, 1), lambda i: (0, 0)),
            pl.BlockSpec((cout, 1), lambda i: (0, 0)),
        ],
        out_specs=pl.BlockSpec((cout, m), lambda i: (0, 0)),
        compiler_params=pltpu.CompilerParams(
            dimension_semantics=("arbitrary",)),
    )(patches_t, p["w2d"], p["b2d"], p["g2d"], p["beta2d"])

    # (Cout, M) -> (Cout, N, OH, OW): next layer's input layout, no transpose.
    return y.reshape(cout, n, oh, ow)


def patch_discriminator_forward(x_nchw, params):
    x = jnp.transpose(x_nchw, (1, 0, 2, 3))          # NCHW -> (C, N, H, W), once
    for p in params:
        x = conv_block_pallas(x, p)
    return jnp.transpose(x, (1, 0, 2, 3))            # back to NCHW, once


# --------------------------- parameter construction ------------------------

def build_patch_discriminator_params(key, in_channels=1, num_filters=8, num_layers=3):
    """Synthetic params matching PatchDiscriminator.__init__ shapes.

    Kernel operands (w2d/b2d/g2d/beta2d) are pre-flattened & pre-cast ONCE here,
    not per forward call (review item). Original f32 tensors kept for the ref.
    """
    specs = [(in_channels, num_filters, False, True)]
    for i in range(num_layers - 2):
        specs.append((num_filters * 2 ** i, num_filters * 2 ** (i + 1), True, True))
    specs.append((num_filters * 2 ** (num_layers - 2), 1, False, False))  # activation=None

    params = []
    for cin, cout, bn, lrelu in specs:
        key, k1, k2, k3, k4 = jax.random.split(key, 5)
        w = 0.05 * jax.random.normal(k1, (cout, cin, 4, 4), jnp.float32)
        b = 0.05 * jax.random.normal(k2, (cout,), jnp.float32)
        if bn:
            gamma = 1.0 + 0.1 * jax.random.normal(k3, (cout,), jnp.float32)
            beta = 0.1 * jax.random.normal(k4, (cout,), jnp.float32)
        else:
            gamma = beta = None
        params.append(dict(
            # reference (f32, torch layouts)
            w=w, b=b, gamma=gamma, beta=beta, lrelu=lrelu, bn=bn,
            # kernel operands (pre-flattened, pre-cast)
            w2d=w.reshape(cout, cin * 16).astype(jnp.bfloat16),     # (Cout, K)
            b2d=b.reshape(cout, 1),
            g2d=(gamma if gamma is not None
                 else jnp.ones((cout,), jnp.float32)).reshape(cout, 1),
            beta2d=(beta if beta is not None
                    else jnp.zeros((cout,), jnp.float32)).reshape(cout, 1),
        ))
    return params


# ------------------------------- reference ---------------------------------

def patch_discriminator_reference(x, params):
    for p in params:
        y = jax.lax.conv_general_dilated(
            x, p["w"], window_strides=(2, 2), padding=((1, 1), (1, 1)),
            dimension_numbers=("NCHW", "OIHW", "NCHW"))
        y = y + p["b"].reshape(1, -1, 1, 1)
        if p["bn"]:
            mean = jnp.mean(y, axis=(0, 2, 3), keepdims=True)
            var = jnp.mean((y - mean) ** 2, axis=(0, 2, 3), keepdims=True)
            y = (y - mean) * jax.lax.rsqrt(var + BN_EPS) \
                * p["gamma"].reshape(1, -1, 1, 1) + p["beta"].reshape(1, -1, 1, 1)
        if p["lrelu"]:
            y = jnp.where(y > 0, y, NEG_SLOPE * y)
        x = y
    return x


# ---------------------------------- main ------------------------------------

if __name__ == "__main__":
    key = jax.random.PRNGKey(0)
    kx, kp = jax.random.split(key)

    # Small config: in_channels=1 (module default), num_filters=8, num_layers=3.
    # 3 ConvBlocks, each halves spatial dims: 32 -> 16 -> 8 -> 4.
    x = jax.random.normal(kx, (2, 1, 32, 32), jnp.float32)
    params = build_patch_discriminator_params(kp, in_channels=1, num_filters=8,
                                              num_layers=3)

    out = jax.block_until_ready(patch_discriminator_forward(x, params))
    assert out.shape == (2, 1, 4, 4), out.shape

    ref = jax.block_until_ready(patch_discriminator_reference(x, params))
    # Mixed-precision tolerance: MXU operands are bf16 (review item), the f32
    # reference uses full-precision convs, and BatchNorm normalizes by the
    # (small) batch std which amplifies relative rounding error.
    max_err = float(jnp.max(jnp.abs(out - ref)))
    assert jnp.allclose(out, ref, atol=3e-2, rtol=3e-2), max_err

    print("KERNEL_OK")
</pallas_src>

<mosaic_0001>
module attributes {stable_mosaic.version = 11 : i64} {
  func.func @_conv_bn_lrelu_kernel(%arg0: i32, %arg1: memref<16x512xbf16, #tpu.memory_space<vmem>>, %arg2: memref<8x16xbf16, #tpu.memory_space<vmem>>, %arg3: memref<8x1xf32, #tpu.memory_space<vmem>>, %arg4: memref<8x1xf32, #tpu.memory_space<vmem>>, %arg5: memref<8x1xf32, #tpu.memory_space<vmem>>, %arg6: memref<8x512xf32, #tpu.memory_space<vmem>>) attributes {dimension_semantics = [#tpu.dimension_semantics<arbitrary>], iteration_bounds = array<i64: 1>, scalar_prefetch = 0 : i64, scratch_operands = 0 : i64, tpu.core_type = #tpu.core_type<tc>, window_params = [{pipeline_mode = #tpu.pipeline_mode<synchronous>, transform_indices = @transform_0, window_bounds = array<i64: 16, 512>}, {pipeline_mode = #tpu.pipeline_mode<synchronous>, transform_indices = @transform_1, window_bounds = array<i64: 8, 16>}, {pipeline_mode = #tpu.pipeline_mode<synchronous>, transform_indices = @transform_2, window_bounds = array<i64: 8, 1>}, {pipeline_mode = #tpu.pipeline_mode<synchronous>, transform_indices = @transform_3, window_bounds = array<i64: 8, 1>}, {pipeline_mode = #tpu.pipeline_mode<synchronous>, transform_indices = @transform_4, window_bounds = array<i64: 8, 1>}, {pipeline_mode = #tpu.pipeline_mode<synchronous>, transform_indices = @transform_5, window_bounds = array<i64: 8, 512>}]} {
    %c0 = arith.constant 0 : index
    %c0_0 = arith.constant 0 : index
    %0 = vector.load %arg2[%c0, %c0_0] : memref<8x16xbf16, #tpu.memory_space<vmem>>, vector<8x16xbf16>
    %c0_1 = arith.constant 0 : index
    %c0_2 = arith.constant 0 : index
    %1 = vector.load %arg1[%c0_1, %c0_2] : memref<16x512xbf16, #tpu.memory_space<vmem>>, vector<16x512xbf16>
    %cst = arith.constant dense<0.000000e+00> : vector<8x512xf32>
    %2 = tpu.matmul %0, %1, %cst {dimension_numbers = #tpu.dot_dimension_numbers<[1], [0], [0], [1], [0, 0, 1, 1], [], []>} : vector<8x16xbf16>, vector<16x512xbf16>, vector<8x512xf32> -> vector<8x512xf32>
    %c0_3 = arith.constant 0 : index
    %c0_4 = arith.constant 0 : index
    %3 = vector.load %arg3[%c0_3, %c0_4] : memref<8x1xf32, #tpu.memory_space<vmem>>, vector<8x1xf32>
    %4 = vector.broadcast %3 : vector<8x1xf32> to vector<8x512xf32>
    %5 = arith.addf %2, %4 : vector<8x512xf32>
    %cst_5 = arith.constant 0.000000e+00 : f32
    %6 = vector.broadcast %cst_5 : f32 to vector<8x512xf32>
    %7 = arith.cmpf ogt, %5, %6 : vector<8x512xf32>
    %cst_6 = arith.constant 2.000000e-01 : f32
    %8 = vector.broadcast %cst_6 : f32 to vector<8x512xf32>
    %9 = arith.mulf %8, %5 : vector<8x512xf32>
    %10 = arith.select %7, %5, %9 : vector<8x512xi1>, vector<8x512xf32>
    %c0_7 = arith.constant 0 : index
    %c0_8 = arith.constant 0 : index
    %11 = vector.load %arg6[%c0_7, %c0_8] : memref<8x512xf32, #tpu.memory_space<vmem>>, vector<8x512xf32>
    tpu.vector_store %arg6[%c0_7, %c0_8], %10 {strides = array<i32>} : memref<8x512xf32, #tpu.memory_space<vmem>>, vector<8x512xf32>,
    return
  }
  func.func @transform_0(%arg0: i32) -> (i32, i32) {
    %c0_i32 = arith.constant 0 : i32
    %c0_i32_0 = arith.constant 0 : i32
    %c0_i32_1 = arith.constant 0 : i32
    return %c0_i32, %c0_i32_0 : i32, i32
  }
  func.func @transform_1(%arg0: i32) -> (i32, i32) {
    %c0_i32 = arith.constant 0 : i32
    %c0_i32_0 = arith.constant 0 : i32
    %c0_i32_1 = arith.constant 0 : i32
    return %c0_i32, %c0_i32_0 : i32, i32
  }
  func.func @transform_2(%arg0: i32) -> (i32, i32) {
    %c0_i32 = arith.constant 0 : i32
    %c0_i32_0 = arith.constant 0 : i32
    %c0_i32_1 = arith.constant 0 : i32
    return %c0_i32, %c0_i32_0 : i32, i32
  }
  func.func @transform_3(%arg0: i32) -> (i32, i32) {
    %c0_i32 = arith.constant 0 : i32
    %c0_i32_0 = arith.constant 0 : i32
    %c0_i32_1 = arith.constant 0 : i32
    return %c0_i32, %c0_i32_0 : i32, i32
  }
  func.func @transform_4(%arg0: i32) -> (i32, i32) {
    %c0_i32 = arith.constant 0 : i32
    %c0_i32_0 = arith.constant 0 : i32
    %c0_i32_1 = arith.constant 0 : i32
    return %c0_i32, %c0_i32_0 : i32, i32
  }
  func.func @transform_5(%arg0: i32) -> (i32, i32) {
    %c0_i32 = arith.constant 0 : i32
    %c0_i32_0 = arith.constant 0 : i32
    %c0_i32_1 = arith.constant 0 : i32
    return %c0_i32, %c0_i32_0 : i32, i32
  }
}

</mosaic_0001>

<llo_original>
// kernel: tpu_custom_call.1
$region0: #{tpu_custom_call.1}
  #allocation0 [shape = 'u32[]', space=smem, size = 0x4, offset = 0x4, fixed_abs, tag = 'smem constant byte address 0x4 - core index']
  #allocation1 [shape = 'u32[144,128]{1,0:T(1,128)}', space=vmem, size = 0x12000, scoped, tag = 'internal scratch']
  %s0 = inlined_call_operand.hbm [shape: bf16[16,512], index: 0, kind: input, shape index: {}]
  %s1 = inlined_call_operand.vmem [shape: bf16[8,16], index: 1, kind: input, shape index: {}]
  %s2 = inlined_call_operand.vmem [shape: f32[8,1], index: 2, kind: input, shape index: {}]
  %s3 = inlined_call_operand.vmem [shape: f32[8,1], index: 3, kind: input, shape index: {}]
  %s4 = inlined_call_operand.vmem [shape: f32[8,1], index: 4, kind: input, shape index: {}]
  %s5 = inlined_call_operand.hbm [shape: f32[8,512], index: 5, kind: output, shape index: {}]
  %s6 = sld [smem:[#allocation0]]
  $region34: #{tpu_custom_call.1} parent=0
    _
  %s8 = ssub.s32 1, %s6
  %s9 = scalar_select 0, %s8, %s6
  $region1: #{tpu_custom_call.1} parent=0
    #allocation2 [shape = 'u8[16384]{0}', space=vmem, size = 0x4000, scoped, tag = 'input window, operand 0, single buffered']
    #allocation3 [shape = 's32[1]{0}', space=sflag, size = 0x4, scoped, tag = 'scoped memory for tpu_custom_call.1']
    #allocation4 [shape = 's32[1]{0}', space=sflag, size = 0x4, scoped, tag = 'scoped memory for tpu_custom_call.1']
    #allocation5 [shape = 'u8[16384]{0}', space=vmem, size = 0x4000, scoped, tag = 'output window, operand 0, single buffered']
    %10 = vsyncpa [#allocation3], 0
    %11 = vsyncpa [#allocation4], 0
    // Predicated region
    $region2: #{tpu_custom_call.1} parent=1 // pred_check
      _
    $region3: #{tpu_custom_call.1} parent=1 // pred_check_branch
      %13 = sbr.rel (0) target = $region5
    $region4: #{tpu_custom_call.1} parent=1 // pred_region
      %s15 = ssub.s32 512, 512
      %16 = vsyncadd [#allocation3], %s15
      %s17 = sshll.u32 [#allocation2], 4
      %s18 = int_to_ptr.vmem [resolvable:$true] %s17
      %23 = dma.hbm_to_vmem [thread:$0]  %s0, 512, %s18, [#allocation3], 256, 256, 16
    $region5: #{tpu_custom_call.1} parent=1 // pred_fallthru
      _
    // Predicated region
    $region6: #{tpu_custom_call.1} parent=1 // pred_check
      _
    $region7: #{tpu_custom_call.1} parent=1 // pred_check_branch
      %25 = sbr.rel (0) target = $region9
    $region8: #{tpu_custom_call.1} parent=1 // pred_region
      _
    $region9: #{tpu_custom_call.1} parent=1 // pred_fallthru
      _
    // Predicated region
    $region10: #{tpu_custom_call.1} parent=1 // pred_check
      _
    $region11: #{tpu_custom_call.1} parent=1 // pred_check_branch
      %27 = sbr.rel (0) target = $region13
    $region12: #{tpu_custom_call.1} parent=1 // pred_region
      _
    $region13: #{tpu_custom_call.1} parent=1 // pred_fallthru
      _
    // Predicated region
    $region14: #{tpu_custom_call.1} parent=1 // pred_check
      _
    $region15: #{tpu_custom_call.1} parent=1 // pred_check_branch
      %29 = sbr.rel (0) target = $region17
    $region16: #{tpu_custom_call.1} parent=1 // pred_region
      _
    $region17: #{tpu_custom_call.1} parent=1 // pred_fallthru
      _
    // Predicated region
    $region18: #{tpu_custom_call.1} parent=1 // pred_check
      _
    $region19: #{tpu_custom_call.1} parent=1 // pred_check_branch
      %31 = sbr.rel (0) target = $region21
    $region20: #{tpu_custom_call.1} parent=1 // pred_region
      _
    $region21: #{tpu_custom_call.1} parent=1 // pred_fallthru
      _
    // Predicated region
    $region22: #{tpu_custom_call.1} parent=1 // pred_check
      _
    $region23: #{tpu_custom_call.1} parent=1 // pred_check_branch
      %33 = sbr.rel (0) target = $region25
    $region24: #{tpu_custom_call.1} parent=1 // pred_region
      %34 = dma.done [#allocation3], 512
    $region25: #{tpu_custom_call.1} parent=1 // pred_fallthru
      _
    %v36 = vld [vmem:[%s1] sm:$0xf]
    %v37 = vld [vmem:[#allocation2] sm:$0xff]
    %v38 = vld [vmem:[#allocation2 + $0x8] sm:$0xff]
    %v39 = vld [vmem:[#allocation2 + $0x10] sm:$0xff]
    %v40 = vld [vmem:[#allocation2 + $0x18] sm:$0xff]
    %v41 = vld [vmem:[%s2] sm:$0xff]
    %43 = vset.pattern.permute.xlu0 0
    %44 = vperm.xlu0 %43, %v41
    %v45 = vpop.permute.xlu0 %44
    %v51 = vunpack.c.l.b16 %v37
    %v52 = vunpack.c.h.b16 %v37
    %v53 = vunpack.c.l.b16 %v38
    %v54 = vunpack.c.h.b16 %v38
    %v55 = vunpack.c.l.b16 %v39
    %v56 = vunpack.c.h.b16 %v39
    %v57 = vunpack.c.l.b16 %v40
    %v58 = vunpack.c.h.b16 %v40
    %v59 = vpack.c.b16 %v55, %v51
    %v60 = vpack.c.b16 %v56, %v52
    %v61 = vpack.c.b16 %v57, %v53
    %v62 = vpack.c.b16 %v58, %v54
    %vm67 = vcmask 130048
    %v69 = vsel %vm67, %v36, 0
    %71 = vmatprep.subr.bf16.mxu0 %v60
    %72 = vmatpush1.bf16.msra.mxu0 %v59
    %73 = vmatprep.subr.bf16.mxu0 0
    %74 = vmatpush1.bf16.msra.mxu0 0
    %75 = vmatprep.subr.bf16.mxu0 0
    %76 = vmatpush1.bf16.msra.mxu0 0
    %77 = vmatprep.subr.bf16.mxu0 0
    %78 = vmatpush1.bf16.msra.mxu0 0
    %79 = vmatprep.subr.bf16.mxu0 0
    %80 = vmatpush1.bf16.msra.mxu0 0
    %81 = vmatprep.subr.bf16.mxu0 0
    %82 = vmatpush1.bf16.msra.mxu0 0
    %83 = vmatprep.subr.bf16.mxu0 0
    %84 = vmatpush1.bf16.msra.mxu0 0
    %85 = vmatprep.subr.bf16.mxu0 0
    %86 = vmatpush1.bf16.msra.mxu0 0
    %87 = vmatprep.subr.bf16.mxu0 0
    %88 = vmatpush1.bf16.msra.mxu0 0
    %89 = vmatprep.subr.bf16.mxu0 0
    %90 = vmatpush1.bf16.msra.mxu0 0
    %91 = vmatprep.subr.bf16.mxu0 0
    %92 = vmatpush1.bf16.msra.mxu0 0
    %93 = vmatprep.subr.bf16.mxu0 0
    %94 = vmatpush1.bf16.msra.mxu0 0
    %95 = vmatprep.subr.bf16.mxu0 0
    %96 = vmatpush1.bf16.msra.mxu0 0
    %97 = vmatprep.subr.bf16.mxu0 0
    %98 = vmatpush1.bf16.msra.mxu0 0
    %99 = vmatprep.subr.bf16.mxu0 0
    %100 = vmatpush1.bf16.msra.mxu0 0
    %101 = vmatprep.subr.bf16.mxu0 0
    %102 = vmatpush1.bf16.msra.mxu0 0
    %103 = vmatprep.mubr.bf16.mxu0 0
    %104 = vmatmul.mubr.bf16.gmra.mrb[0].mxu0 %v69
    %v105 = vpop.f32.mrb[0].mxu0
    %v106 = vadd.f32 %v45, %v105
    %v107 = vpop.f32.mrb[0].mxu0
    %v108 = vadd.f32 %v45, %v107
    %v109 = vpop.f32.mrb[0].mxu0
    %v110 = vpop.f32.mrb[0].mxu0
    %111 = vdwg.mxu0
    %112 = vmatprep.subr.bf16.mxu0 %v62
    %113 = vmatpush1.bf16.msra.mxu0 %v61
    %114 = vmatprep.subr.bf16.mxu0 0
    %115 = vmatpush1.bf16.msra.mxu0 0
    %116 = vmatprep.subr.bf16.mxu0 0
    %117 = vmatpush1.bf16.msra.mxu0 0
    %118 = vmatprep.subr.bf16.mxu0 0
    %119 = vmatpush1.bf16.msra.mxu0 0
    %120 = vmatprep.subr.bf16.mxu0 0
    %121 = vmatpush1.bf16.msra.mxu0 0
    %122 = vmatprep.subr.bf16.mxu0 0
    %123 = vmatpush1.bf16.msra.mxu0 0
    %124 = vmatprep.subr.bf16.mxu0 0
    %125 = vmatpush1.bf16.msra.mxu0 0
    %126 = vmatprep.subr.bf16.mxu0 0
    %127 = vmatpush1.bf16.msra.mxu0 0
    %128 = vmatprep.subr.bf16.mxu0 0
    %129 = vmatpush1.bf16.msra.mxu0 0
    %130 = vmatprep.subr.bf16.mxu0 0
    %131 = vmatpush1.bf16.msra.mxu0 0
    %132 = vmatprep.subr.bf16.mxu0 0
    %133 = vmatpush1.bf16.msra.mxu0 0
    %134 = vmatprep.subr.bf16.mxu0 0
    %135 = vmatpush1.bf16.msra.mxu0 0
    %136 = vmatprep.subr.bf16.mxu0 0
    %137 = vmatpush1.bf16.msra.mxu0 0
    %138 = vmatprep.subr.bf16.mxu0 0
    %139 = vmatpush1.bf16.msra.mxu0 0
    %140 = vmatprep.subr.bf16.mxu0 0
    %141 = vmatpush1.bf16.msra.mxu0 0
    %142 = vmatprep.subr.bf16.mxu0 0
    %143 = vmatpush1.bf16.msra.mxu0 0
    %144 = vmatprep.mubr.bf16.mxu0 0
    %145 = vmatmul.mubr.bf16.gmra.mrb[0].mxu0 %v69
    %v146 = vpop.f32.mrb[0].mxu0
    %v147 = vadd.f32 %v45, %v146
    %v148 = vpop.f32.mrb[0].mxu0
    %v149 = vadd.f32 %v45, %v148
    %v150 = vpop.f32.mrb[0].mxu0
    %v151 = vpop.f32.mrb[0].mxu0
    %152 = vdwg.mxu0
    %vm153 = vcmp.gt.f32.partialorder %v106, 0.0
    %vm154 = vcmp.gt.f32.partialorder %v108, 0.0
    %vm155 = vcmp.gt.f32.partialorder %v147, 0.0
    %vm156 = vcmp.gt.f32.partialorder %v149, 0.0
    %v157 = vmul.f32 %v106, 0.2
    %v158 = vmul.f32 %v108, 0.2
    %v159 = vmul.f32 %v147, 0.2
    %v160 = vmul.f32 %v149, 0.2
    %v161 = vsel %vm153, %v106, %v157
    %v162 = vsel %vm154, %v108, %v158
    %v163 = vsel %vm155, %v147, %v159
    %v164 = vsel %vm156, %v149, %v160
    %165 = vst [vmem:[#allocation5] sm:$0xff] %v161
    %166 = vst [vmem:[#allocation5 + $0x8] sm:$0xff] %v162
    %167 = vst [vmem:[#allocation5 + $0x10] sm:$0xff] %v163
    %168 = vst [vmem:[#allocation5 + $0x18] sm:$0xff] %v164
    // Predicated region
    $region26: #{tpu_custom_call.1} parent=1 // pred_check
      _
    $region27: #{tpu_custom_call.1} parent=1 // pred_check_branch
      %170 = sbr.rel (0) target = $region29
    $region28: #{tpu_custom_call.1} parent=1 // pred_region
      %s172 = ssub.s32 512, 512
      %173 = vsyncadd [#allocation4], %s172
      %s175 = sshll.u32 [#allocation5], 4
      %s176 = int_to_ptr.vmem [resolvable:$true] %s175
      %178 = dma.vmem_to_hbm [thread:$0]  %s176, 512, %s5, [#allocation4]
    $region29: #{tpu_custom_call.1} parent=1 // pred_fallthru
      _
    // Predicated region
    $region30: #{tpu_custom_call.1} parent=1 // pred_check
      _
    $region31: #{tpu_custom_call.1} parent=1 // pred_check_branch
      %180 = sbr.rel (0) target = $region33
    $region32: #{tpu_custom_call.1} parent=1 // pred_region
      %181 = dma.done [#allocation4], 512
    $region33: #{tpu_custom_call.1} parent=1 // pred_fallthru
      _
    %182 = vsyncpa [#allocation3], 1
    %183 = vsyncpa [#allocation4], 1

</llo_original>
